<compile_context>
chip_gen: v7x
topology: tpu7x:2x2x1
jax: 0.10.0
libtpu: 0.0.40
codegen_flags: <defaults>
</compile_context>

<pallas_src>
import functools

import jax
import jax.numpy as jnp
from jax.experimental import pallas as pl
from jax.experimental.pallas import tpu as pltpu

GRU_HIDDEN = 32          # stateTensors width (GRU itself is unused in forward)
MM_POS = 2 * 25          # minimap positions
MM_IN = 3                # minimap features per position
MM_HID = 4               # m_lin1 output per position
MM_FLAT_IN = MM_POS * MM_IN     # 150
MM_FLAT_HID = MM_POS * MM_HID   # 200
WY = 256                 # fused first-layer width: 32 (seq) + 200 (minimap) + pad


def _round_up(x, m):
    return ((x + m - 1) // m) * m


# ----------------------------------------------------------------------------- kernel
def net_kernel(x_ref, wfused_ref, wslab2_ref, bslab_ref, wl3_ref, logp_ref):
    x_in = x_ref[...]                               # (TB, w_in) = [input | minimap | pad]

    b_fused = bslab_ref[0:1, :]                     # (1, WY) = [b_seq | tiled m_b1 | 0]
    b_m2 = bslab_ref[1:2, 0:32]
    b_l1 = bslab_ref[2:3, 0:32]
    b_l2 = bslab_ref[3:4, 0:32]
    b_l3 = bslab_ref[4:5, 0:2]

    # Fused first layer: one matmul + one tanh covers both branches.
    #   y[:,  0:32]  = tanh(input   @ W_seq           + b_seq)
    #   y[:, 32:232] = tanh(minimap @ blkdiag(m_lin1) + tiled m_b1)
    y = jnp.tanh(jnp.dot(x_in, wfused_ref[...],
                         preferred_element_type=jnp.float32) + b_fused)       # (TB, WY)

    # m_lin2 lifted to Y layout (zero rows under the seq columns): no lane slicing.
    x2 = jnp.tanh(jnp.dot(y, wslab2_ref[0:WY, :],
                          preferred_element_type=jnp.float32) + b_m2)          # (TB, 32)

    # lin1 over cat([x1, x2]): Y @ L1a_pad selects the x1 half, plus x2 @ L1b.
    x = jnp.tanh(jnp.dot(y, wslab2_ref[WY:2 * WY, :],
                         preferred_element_type=jnp.float32)
                 + jnp.dot(x2, wslab2_ref[2 * WY:2 * WY + 32, :],
                           preferred_element_type=jnp.float32)
                 + b_l1)                                                       # (TB, 32)
    x = jnp.tanh(jnp.dot(x, wslab2_ref[2 * WY + 32:2 * WY + 64, :],
                         preferred_element_type=jnp.float32) + b_l2)           # (TB, 32)
    logits = jnp.dot(x, wl3_ref[...],
                     preferred_element_type=jnp.float32) + b_l3                # (TB, 2)

    # LogSoftmax(dim=1); 2-wide epilogue, XLU/EUP have slack so the generic
    # stable form is fine.
    m = jnp.max(logits, axis=1, keepdims=True)
    lse = m + jnp.log(jnp.sum(jnp.exp(logits - m), axis=1, keepdims=True))
    logp_ref[...] = logits - lse


# ----------------------------------------------------------------------------- packing (load time)
def pack_params(params, input_dim):
    """Pack all layer weights into resident slabs.  Call ONCE at model-load
    time (the kron + scatters are far more XLA work than the kernel itself);
    pass the result to net_forward_jit for every inference call."""
    D = input_dim
    w_in = _round_up(D + MM_FLAT_IN, 8)

    # Fused first layer: [input | minimap_flat] @ wfused.
    #   cols  0:32   <- seq Linear(D, 32)
    #   cols 32:232  <- block-diagonal m_lin1 = kron(I_50, W(3,4))
    wbig = jnp.kron(jnp.eye(MM_POS, dtype=jnp.float32),
                    params["m_w1"].astype(jnp.float32))                     # (150, 200)
    wfused = jnp.zeros((w_in, WY), jnp.float32)
    wfused = wfused.at[0:D, 0:32].set(params["w0"])
    wfused = wfused.at[D:D + MM_FLAT_IN, 32:32 + MM_FLAT_HID].set(wbig)

    # Second slab (all (., 32) weights, 8-aligned row offsets):
    #   [0     : WY)      m_lin2 lifted to Y layout (rows 32:232 = m_w2)
    #   [WY    : 2*WY)    lin1 "x" half lifted to Y layout (rows 0:32 = w_l1[:32])
    #   [2*WY  : +32)     lin1 "x2" half
    #   [2*WY+32 : +32)   lin2
    wslab2 = jnp.zeros((2 * WY + 64, 32), jnp.float32)
    wslab2 = wslab2.at[32:32 + MM_FLAT_HID, :].set(params["m_w2"])
    wslab2 = wslab2.at[WY:WY + 32, :].set(params["w_l1"][:32, :])
    wslab2 = wslab2.at[2 * WY:2 * WY + 32, :].set(params["w_l1"][32:, :])
    wslab2 = wslab2.at[2 * WY + 32:2 * WY + 64, :].set(params["w_l2"])

    bslab = jnp.zeros((8, WY), jnp.float32)
    bslab = bslab.at[0, 0:32].set(params["b0"])
    bslab = bslab.at[0, 32:32 + MM_FLAT_HID].set(jnp.tile(params["m_b1"], MM_POS))
    bslab = bslab.at[1, :32].set(params["m_b2"])
    bslab = bslab.at[2, :32].set(params["b_l1"])
    bslab = bslab.at[3, :32].set(params["b_l2"])
    bslab = bslab.at[4, :2].set(params["b_l3"])

    return {"wfused": wfused, "wslab2": wslab2, "bslab": bslab,
            "wl3": params["w_l3"].astype(jnp.float32)}


# ----------------------------------------------------------------------------- wrapper
def _pick_tile_b(batch, max_tile=2048):
    """Batch tile: multiple of 8 dividing batch, <= max_tile.  Prefer an even
    number (>= 2) of grid steps (both v7x TensorCores busy), then the largest
    such tile (per-step fixed cost ~0.35 us, so fewer/larger steps win)."""
    if batch <= 8 or batch % 8 != 0:
        return batch            # single step; can't split without batch padding
    cands = [t for t in range(8, min(batch, max_tile) + 1, 8) if batch % t == 0]
    even = [t for t in cands if (batch // t) >= 2 and (batch // t) % 2 == 0]
    multi = [t for t in cands if (batch // t) >= 2]
    if even:
        return max(even)
    if multi:
        return max(multi)
    return max(cands)


def net_forward(packed, input_tensor, minimap_tensor, state_tensors=None, *, tile_b=None):
    B, D = input_tensor.shape
    if state_tensors is None:
        state_tensors = jnp.zeros((B, GRU_HIDDEN), jnp.float32)

    w_in = packed["wfused"].shape[0]
    mm_flat = minimap_tensor.reshape(B, -1).astype(jnp.float32)              # (B, 150)
    assert mm_flat.shape[1] == MM_FLAT_IN
    # TODO(synk): feed bf16 here (kernel accumulates in f32 anyway) if the
    # producer can emit bf16 -- halves the dominant input HBM traffic.
    parts = [input_tensor.astype(jnp.float32), mm_flat]
    pad = w_in - (D + MM_FLAT_IN)
    if pad:
        parts.append(jnp.zeros((B, pad), jnp.float32))
    x_slab = jnp.concatenate(parts, axis=1)                                  # (B, w_in)

    if tile_b is None:
        tile_b = _pick_tile_b(B)
    assert B % tile_b == 0
    num_steps = B // tile_b

    # Batch-tiled input block; deepen pipelining when there are enough steps.
    x_spec = pl.BlockSpec((tile_b, w_in), lambda i: (i, 0))
    if num_steps >= 3:
        try:
            x_spec = pl.BlockSpec((tile_b, w_in), lambda i: (i, 0),
                                  pipeline_mode=pl.Buffered(3))
        except TypeError:       # older jax without pipeline_mode kwarg
            pass

    in_specs = [
        x_spec,
        pl.BlockSpec(packed["wfused"].shape, lambda i: (0, 0)),   # resident weights:
        pl.BlockSpec(packed["wslab2"].shape, lambda i: (0, 0)),   # fetched once,
        pl.BlockSpec(packed["bslab"].shape, lambda i: (0, 0)),    # reused across
        pl.BlockSpec(packed["wl3"].shape, lambda i: (0, 0)),      # grid steps
    ]
    out_specs = pl.BlockSpec((tile_b, 2), lambda i: (i, 0))
    out_shape = jax.ShapeDtypeStruct((B, 2), jnp.float32)

    # Generation-aware scoped-VMEM request: only when the estimate could push
    # past v5e's 16 MiB default; capped under v7x's 64 MiB physical VMEM.
    est = 4 * (3 * tile_b * w_in                                   # input buffers
               + w_in * WY + (2 * WY + 64) * 32 + 8 * WY + 32 * 2  # resident weights
               + 2 * tile_b * 2                                    # output buffers
               + tile_b * (WY + 4 * 32 + 8))                       # intermediates
    cp = dict(dimension_semantics=("parallel",))
    if est > 12 * 1024 * 1024:
        cp["vmem_limit_bytes"] = int(min(max(2 * est, 16 * 1024 * 1024),
                                         48 * 1024 * 1024))

    logp = pl.pallas_call(
        net_kernel,
        grid=(num_steps,),
        in_specs=in_specs,
        out_specs=out_specs,
        out_shape=out_shape,
        compiler_params=pltpu.CompilerParams(**cp),
    )(x_slab, packed["wfused"], packed["wslab2"], packed["bslab"], packed["wl3"])

    # Forward never touches the GRU / stateTensors: return it unchanged.
    return logp, state_tensors


# jit entry point: wrapper concat/casts fuse; packed slabs are ordinary args,
# so pack_params runs once, outside the inference loop.
net_forward_jit = jax.jit(net_forward, static_argnames=("tile_b",))


# ----------------------------------------------------------------------------- params / reference
def init_params(key, input_dim):
    def lin(k, fan_in, fan_out):
        k1, k2 = jax.random.split(k)
        bound = 1.0 / (fan_in ** 0.5)
        w = jax.random.uniform(k1, (fan_in, fan_out), jnp.float32, -bound, bound)
        b = jax.random.uniform(k2, (fan_out,), jnp.float32, -bound, bound)
        return w, b

    ks = jax.random.split(key, 6)
    p = {}
    p["w0"], p["b0"] = lin(ks[0], input_dim, 32)            # seq: Linear(D, 32)
    p["m_w1"], p["m_b1"] = lin(ks[1], MM_IN, MM_HID)        # m_lin1: Linear(3, 4)
    p["m_w2"], p["m_b2"] = lin(ks[2], MM_FLAT_HID, 32)      # m_lin2: Linear(200, 32)
    p["w_l1"], p["b_l1"] = lin(ks[3], 64, 32)               # lin1 (see TODO above)
    p["w_l2"], p["b_l2"] = lin(ks[4], 32, 32)               # lin2
    p["w_l3"], p["b_l3"] = lin(ks[5], 32, 2)                # lin3
    return p


_mm = functools.partial(jnp.matmul, precision=jax.lax.Precision.HIGHEST)


def reference_forward(input_tensor, minimap_tensor, params, state_tensors=None):
    """Pure-JAX mirror of the PyTorch forward (for verification)."""
    B = input_tensor.shape[0]
    if state_tensors is None:
        state_tensors = jnp.zeros((B, GRU_HIDDEN), jnp.float32)
    x2 = jnp.tanh(_mm(minimap_tensor, params["m_w1"]) + params["m_b1"])      # (B,2,25,4)
    x2 = x2.reshape(B, -1)                                                   # (B,200)
    x2 = jnp.tanh(_mm(x2, params["m_w2"]) + params["m_b2"])                  # (B,32)
    x = jnp.tanh(_mm(input_tensor, params["w0"]) + params["b0"])             # (B,32)
    x = x.reshape(B, -1)
    x = jnp.concatenate([x, x2], axis=1)                                     # (B,64)
    x = jnp.tanh(_mm(x, params["w_l1"]) + params["b_l1"])
    x = jnp.tanh(_mm(x, params["w_l2"]) + params["b_l2"])
    x = _mm(x, params["w_l3"]) + params["b_l3"]
    return jax.nn.log_softmax(x, axis=1), state_tensors


# ----------------------------------------------------------------------------- demo
if __name__ == "__main__":
    B, D = 16, 16   # small demo shapes; tile_b=8 -> 2 grid steps
    key = jax.random.PRNGKey(0)
    k_in, k_mm, k_p = jax.random.split(key, 3)

    input_tensor = jax.random.normal(k_in, (B, D), jnp.float32)
    minimap_tensor = jax.random.normal(k_mm, (B, 2, 25, MM_IN), jnp.float32)
    params = init_params(k_p, D)

    packed = pack_params(params, D)     # once, at "model-load" time

    logp, state = net_forward_jit(packed, input_tensor, minimap_tensor)
    jax.block_until_ready((logp, state))

    ref_logp, ref_state = reference_forward(input_tensor, minimap_tensor, params)
    assert logp.shape == (B, 2) and state.shape == (B, GRU_HIDDEN)
    # kernel dots use default MXU precision; reference uses Precision.HIGHEST
    assert jnp.allclose(logp, ref_logp, atol=2e-4, rtol=2e-4), \
        float(jnp.max(jnp.abs(logp - ref_logp)))
    assert jnp.allclose(state, ref_state)
    print("KERNEL_OK")
</pallas_src>

<mosaic_0001>
module attributes {stable_mosaic.version = 11 : i64} {
  func.func @net_kernel(%arg0: i32, %arg1: memref<8x168xf32, #tpu.memory_space<vmem>>, %arg2: memref<168x256xf32, #tpu.memory_space<vmem>>, %arg3: memref<576x32xf32, #tpu.memory_space<vmem>>, %arg4: memref<8x256xf32, #tpu.memory_space<vmem>>, %arg5: memref<32x2xf32, #tpu.memory_space<vmem>>, %arg6: memref<8x2xf32, #tpu.memory_space<vmem>>) attributes {dimension_semantics = [#tpu.dimension_semantics<parallel>], iteration_bounds = array<i64: 2>, scalar_prefetch = 0 : i64, scratch_operands = 0 : i64, tpu.core_type = #tpu.core_type<tc>, window_params = [{transform_indices = @transform_0, window_bounds = array<i64: 8, 168>}, {pipeline_mode = #tpu.pipeline_mode<synchronous>, transform_indices = @transform_1, window_bounds = array<i64: 168, 256>}, {pipeline_mode = #tpu.pipeline_mode<synchronous>, transform_indices = @transform_2, window_bounds = array<i64: 576, 32>}, {pipeline_mode = #tpu.pipeline_mode<synchronous>, transform_indices = @transform_3, window_bounds = array<i64: 8, 256>}, {pipeline_mode = #tpu.pipeline_mode<synchronous>, transform_indices = @transform_4, window_bounds = array<i64: 32, 2>}, {transform_indices = @transform_5, window_bounds = array<i64: 8, 2>}]} {
    %c0 = arith.constant 0 : index
    %c0_0 = arith.constant 0 : index
    %0 = vector.load %arg1[%c0, %c0_0] : memref<8x168xf32, #tpu.memory_space<vmem>>, vector<8x168xf32>
    %c0_1 = arith.constant 0 : index
    %c0_2 = arith.constant 0 : index
    %1 = vector.load %arg4[%c0_1, %c0_2] : memref<8x256xf32, #tpu.memory_space<vmem>>, vector<1x256xf32>
    %c1 = arith.constant 1 : index
    %c0_3 = arith.constant 0 : index
    %2 = vector.load %arg4[%c1, %c0_3] : memref<8x256xf32, #tpu.memory_space<vmem>>, vector<1x32xf32>
    %c2 = arith.constant 2 : index
    %c0_4 = arith.constant 0 : index
    %3 = vector.load %arg4[%c2, %c0_4] : memref<8x256xf32, #tpu.memory_space<vmem>>, vector<1x32xf32>
    %c3 = arith.constant 3 : index
    %c0_5 = arith.constant 0 : index
    %4 = vector.load %arg4[%c3, %c0_5] : memref<8x256xf32, #tpu.memory_space<vmem>>, vector<1x32xf32>
    %c4 = arith.constant 4 : index
    %c0_6 = arith.constant 0 : index
    %5 = vector.load %arg4[%c4, %c0_6] : memref<8x256xf32, #tpu.memory_space<vmem>>, vector<1x2xf32>
    %c0_7 = arith.constant 0 : index
    %c0_8 = arith.constant 0 : index
    %6 = vector.load %arg2[%c0_7, %c0_8] : memref<168x256xf32, #tpu.memory_space<vmem>>, vector<168x256xf32>
    %cst = arith.constant dense<0.000000e+00> : vector<8x256xf32>
    %7 = tpu.matmul %0, %6, %cst {dimension_numbers = #tpu.dot_dimension_numbers<[1], [0], [0], [1], [0, 0, 1, 1], [], []>} : vector<8x168xf32>, vector<168x256xf32>, vector<8x256xf32> -> vector<8x256xf32>
    %8 = vector.broadcast %1 : vector<1x256xf32> to vector<8x256xf32>
    %9 = arith.addf %7, %8 : vector<8x256xf32>
    %10 = math.tanh %9 : vector<8x256xf32>
    %c0_9 = arith.constant 0 : index
    %c0_10 = arith.constant 0 : index
    %11 = vector.load %arg3[%c0_9, %c0_10] : memref<576x32xf32, #tpu.memory_space<vmem>>, vector<256x32xf32>
    %cst_11 = arith.constant dense<0.000000e+00> : vector<8x32xf32>
    %12 = tpu.matmul %10, %11, %cst_11 {dimension_numbers = #tpu.dot_dimension_numbers<[1], [0], [0], [1], [0, 0, 1, 1], [], []>} : vector<8x256xf32>, vector<256x32xf32>, vector<8x32xf32> -> vector<8x32xf32>
    %13 = vector.broadcast %2 : vector<1x32xf32> to vector<8x32xf32>
    %14 = arith.addf %12, %13 : vector<8x32xf32>
    %15 = math.tanh %14 : vector<8x32xf32>
    %c256 = arith.constant 256 : index
    %c0_12 = arith.constant 0 : index
    %16 = vector.load %arg3[%c256, %c0_12] : memref<576x32xf32, #tpu.memory_space<vmem>>, vector<256x32xf32>
    %cst_13 = arith.constant dense<0.000000e+00> : vector<8x32xf32>
    %17 = tpu.matmul %10, %16, %cst_13 {dimension_numbers = #tpu.dot_dimension_numbers<[1], [0], [0], [1], [0, 0, 1, 1], [], []>} : vector<8x256xf32>, vector<256x32xf32>, vector<8x32xf32> -> vector<8x32xf32>
    %c512 = arith.constant 512 : index
    %c0_14 = arith.constant 0 : index
    %18 = vector.load %arg3[%c512, %c0_14] : memref<576x32xf32, #tpu.memory_space<vmem>>, vector<32x32xf32>
    %cst_15 = arith.constant dense<0.000000e+00> : vector<8x32xf32>
    %19 = tpu.matmul %15, %18, %cst_15 {dimension_numbers = #tpu.dot_dimension_numbers<[1], [0], [0], [1], [0, 0, 1, 1], [], []>} : vector<8x32xf32>, vector<32x32xf32>, vector<8x32xf32> -> vector<8x32xf32>
    %20 = arith.addf %17, %19 : vector<8x32xf32>
    %21 = vector.broadcast %3 : vector<1x32xf32> to vector<8x32xf32>
    %22 = arith.addf %20, %21 : vector<8x32xf32>
    %23 = math.tanh %22 : vector<8x32xf32>
    %c544 = arith.constant 544 : index
    %c0_16 = arith.constant 0 : index
    %24 = vector.load %arg3[%c544, %c0_16] : memref<576x32xf32, #tpu.memory_space<vmem>>, vector<32x32xf32>
    %cst_17 = arith.constant dense<0.000000e+00> : vector<8x32xf32>
    %25 = tpu.matmul %23, %24, %cst_17 {dimension_numbers = #tpu.dot_dimension_numbers<[1], [0], [0], [1], [0, 0, 1, 1], [], []>} : vector<8x32xf32>, vector<32x32xf32>, vector<8x32xf32> -> vector<8x32xf32>
    %26 = vector.broadcast %4 : vector<1x32xf32> to vector<8x32xf32>
    %27 = arith.addf %25, %26 : vector<8x32xf32>
    %28 = math.tanh %27 : vector<8x32xf32>
    %c0_18 = arith.constant 0 : index
    %c0_19 = arith.constant 0 : index
    %29 = vector.load %arg5[%c0_18, %c0_19] : memref<32x2xf32, #tpu.memory_space<vmem>>, vector<32x2xf32>
    %cst_20 = arith.constant dense<0.000000e+00> : vector<8x2xf32>
    %30 = tpu.matmul %28, %29, %cst_20 {dimension_numbers = #tpu.dot_dimension_numbers<[1], [0], [0], [1], [0, 0, 1, 1], [], []>} : vector<8x32xf32>, vector<32x2xf32>, vector<8x2xf32> -> vector<8x2xf32>
    %31 = vector.broadcast %5 : vector<1x2xf32> to vector<8x2xf32>
    %32 = arith.addf %30, %31 : vector<8x2xf32>
    %cst_21 = arith.constant dense<0xFF800000> : vector<8xf32>
    %33 = vector.multi_reduction <maximumf>, %32, %cst_21 [1] : vector<8x2xf32> to vector<8xf32>
    %34 = vector.shape_cast %33 : vector<8xf32> to vector<8x1xf32>
    %35 = vector.broadcast %34 : vector<8x1xf32> to vector<8x2xf32>
    %36 = arith.subf %32, %35 : vector<8x2xf32>
    %37 = math.exp %36 : vector<8x2xf32>
    %cst_22 = arith.constant dense<0.000000e+00> : vector<8xf32>
    %38 = vector.multi_reduction <add>, %37, %cst_22 [1] : vector<8x2xf32> to vector<8xf32>
    %39 = vector.shape_cast %38 : vector<8xf32> to vector<8x1xf32>
    %40 = math.log %39 : vector<8x1xf32>
    %41 = arith.addf %34, %40 : vector<8x1xf32>
    %42 = vector.broadcast %41 : vector<8x1xf32> to vector<8x2xf32>
    %43 = arith.subf %32, %42 : vector<8x2xf32>
    %c0_23 = arith.constant 0 : index
    %c0_24 = arith.constant 0 : index
    %44 = vector.load %arg6[%c0_23, %c0_24] : memref<8x2xf32, #tpu.memory_space<vmem>>, vector<8x2xf32>
    tpu.vector_store %arg6[%c0_23, %c0_24], %43 {strides = array<i32>} : memref<8x2xf32, #tpu.memory_space<vmem>>, vector<8x2xf32>,
    return
  }
  func.func @transform_0(%arg0: i32) -> (i32, i32) {
    %c0_i32 = arith.constant 0 : i32
    %c0_i32_0 = arith.constant 0 : i32
    return %arg0, %c0_i32 : i32, i32
  }
  func.func @transform_1(%arg0: i32) -> (i32, i32) {
    %c0_i32 = arith.constant 0 : i32
    %c0_i32_0 = arith.constant 0 : i32
    %c0_i32_1 = arith.constant 0 : i32
    return %c0_i32, %c0_i32_0 : i32, i32
  }
  func.func @transform_2(%arg0: i32) -> (i32, i32) {
    %c0_i32 = arith.constant 0 : i32
    %c0_i32_0 = arith.constant 0 : i32
    %c0_i32_1 = arith.constant 0 : i32
    return %c0_i32, %c0_i32_0 : i32, i32
  }
  func.func @transform_3(%arg0: i32) -> (i32, i32) {
    %c0_i32 = arith.constant 0 : i32
    %c0_i32_0 = arith.constant 0 : i32
    %c0_i32_1 = arith.constant 0 : i32
    return %c0_i32, %c0_i32_0 : i32, i32
  }
  func.func @transform_4(%arg0: i32) -> (i32, i32) {
    %c0_i32 = arith.constant 0 : i32
    %c0_i32_0 = arith.constant 0 : i32
    %c0_i32_1 = arith.constant 0 : i32
    return %c0_i32, %c0_i32_0 : i32, i32
  }
  func.func @transform_5(%arg0: i32) -> (i32, i32) {
    %c0_i32 = arith.constant 0 : i32
    %c0_i32_0 = arith.constant 0 : i32
    return %arg0, %c0_i32 : i32, i32
  }
}

</mosaic_0001>

<llo_original>
// kernel: net_forward.1
$region0: #{net_forward.1}
  #allocation0 [shape = 'u32[]', space=smem, size = 0x4, offset = 0x4, fixed_abs, tag = 'smem constant byte address 0x4 - core index']
  #allocation1 [shape = 'u32[144,128]{1,0:T(1,128)}', space=vmem, size = 0x12000, scoped, tag = 'internal scratch']
  %s0 = inlined_call_operand.vmem [shape: f32[16,168], index: 0, kind: input, shape index: {}]
  %s1 = inlined_call_operand.vmem [shape: f32[168,256], index: 1, kind: input, shape index: {}]
  %s2 = inlined_call_operand.vmem [shape: f32[576,32], index: 2, kind: input, shape index: {}]
  %s3 = inlined_call_operand.vmem [shape: f32[8,256], index: 3, kind: input, shape index: {}]
  %s4 = inlined_call_operand.vmem [shape: f32[32,2], index: 4, kind: input, shape index: {}]
  %s5 = inlined_call_operand.vmem [shape: f32[16,2], index: 5, kind: output, shape index: {}]
  %s6 = sld [smem:[#allocation0]]
  $region53: #{net_forward.1} parent=0
    _
  %s8 = ssub.s32 1, %s6
  %s9 = scalar_select 0, %s8, %s6
  loop: start=0, step=1, limit=4
  $region2: #{net_forward.1} parent=0 // loop_pre_header
    _
  $region3: #{net_forward.1} parent=0 // loop_header
    %s11 = sphi 0, %s15
    %p12 = scmp.ge.s32.totalorder %s11, 4
    %s21 = sphi 0, %s23
    %s24 = sphi 0, %s21
    %s25 = sphi 0, %s24
    %s41 = sphi 0, %s25
    %s45 = sphi 0, %s45
    %s47 = sphi 0, %s45
    %s48 = sphi 0, %s47
    %s62 = sphi 0, %s48
    %s66 = sphi 0, %s66
    %s68 = sphi 0, %s66
    %s69 = sphi 0, %s68
    %s83 = sphi 0, %s69
    %s87 = sphi 0, %s87
    %s89 = sphi 0, %s87
    %s90 = sphi 0, %s89
    %s104 = sphi 0, %s90
    %s108 = sphi 0, %s108
    %s110 = sphi 0, %s108
    %s111 = sphi 0, %s110
    %s125 = sphi 0, %s111
    %s131 = sphi 0, %s133
    %s134 = sphi 0, %s131
    %s135 = sphi 0, %s134
    %s151 = sphi 0, %s135
  $region4: #{net_forward.1} parent=0 // loop_header_branch
    %14 = sbr.rel (%p12) target = $region8
  $region5: #{net_forward.1} parent=0 // loop_body
    %s16 = ssub.s32 %s11, 1
    %s17 = ssub.s32 %s11, 2
    %s18 = sadd.s32 %s11, 1
    %s19 = ssub.s32 %s11, %s18
    %p20 = scmp.eq.s32.totalorder %s19, 0
    %s22 = sadd.s32 %s21, 1
    %s23 = scalar_select %p20, %s21, %s22
    %p26 = pneg %p20
    %p27 = scmp.eq.s32.totalorder %s11, 1
    %p28 = por %p26, %p27
    %p29 = scmp.ne.s32.totalorder %s21, %s24
    %p30 = scmp.eq.s32.totalorder %s11, 0
    %p31 = por %p29, %p30
    %p32 = scmp.ne.s32.totalorder %s21, %s24
    %p33 = scmp.eq.s32.totalorder %s16, 1
    %p34 = por %p32, %p33
    %p35 = scmp.ne.s32.totalorder %s24, %s25
    %p36 = scmp.eq.s32.totalorder %s16, 0
    %p37 = por %p35, %p36
    %p38 = scmp.ne.s32.totalorder %s24, %s25
    %p39 = scmp.eq.s32.totalorder %s17, 1
    %p40 = por %p38, %p39
    %p42 = scmp.ne.s32.totalorder %s25, %s41
    %p43 = scmp.eq.s32.totalorder %s17, 0
    %p44 = por %p42, %p43
    %s46 = sadd.s32 %s45, 1
    %p49 = scmp.eq.s32.totalorder %s11, 1
    %p50 = scmp.ne.s32.totalorder %s45, %s47
    %p51 = scmp.eq.s32.totalorder %s11, 0
    %p52 = por %p50, %p51
    %p53 = scmp.ne.s32.totalorder %s45, %s47
    %p54 = scmp.eq.s32.totalorder %s16, 1
    %p55 = por %p53, %p54
    %p56 = scmp.ne.s32.totalorder %s47, %s48
    %p57 = scmp.eq.s32.totalorder %s16, 0
    %p58 = por %p56, %p57
    %p59 = scmp.ne.s32.totalorder %s47, %s48
    %p60 = scmp.eq.s32.totalorder %s17, 1
    %p61 = por %p59, %p60
    %p63 = scmp.ne.s32.totalorder %s48, %s62
    %p64 = scmp.eq.s32.totalorder %s17, 0
    %p65 = por %p63, %p64
    %s67 = sadd.s32 %s66, 1
    %p70 = scmp.eq.s32.totalorder %s11, 1
    %p71 = scmp.ne.s32.totalorder %s66, %s68
    %p72 = scmp.eq.s32.totalorder %s11, 0
    %p73 = por %p71, %p72
    %p74 = scmp.ne.s32.totalorder %s66, %s68
    %p75 = scmp.eq.s32.totalorder %s16, 1
    %p76 = por %p74, %p75
    %p77 = scmp.ne.s32.totalorder %s68, %s69
    %p78 = scmp.eq.s32.totalorder %s16, 0
    %p79 = por %p77, %p78
    %p80 = scmp.ne.s32.totalorder %s68, %s69
    %p81 = scmp.eq.s32.totalorder %s17, 1
    %p82 = por %p80, %p81
    %p84 = scmp.ne.s32.totalorder %s69, %s83
    %p85 = scmp.eq.s32.totalorder %s17, 0
    %p86 = por %p84, %p85
    %s88 = sadd.s32 %s87, 1
    %p91 = scmp.eq.s32.totalorder %s11, 1
    %p92 = scmp.ne.s32.totalorder %s87, %s89
    %p93 = scmp.eq.s32.totalorder %s11, 0
    %p94 = por %p92, %p93
    %p95 = scmp.ne.s32.totalorder %s87, %s89
    %p96 = scmp.eq.s32.totalorder %s16, 1
    %p97 = por %p95, %p96
    %p98 = scmp.ne.s32.totalorder %s89, %s90
    %p99 = scmp.eq.s32.totalorder %s16, 0
    %p100 = por %p98, %p99
    %p101 = scmp.ne.s32.totalorder %s89, %s90
    %p102 = scmp.eq.s32.totalorder %s17, 1
    %p103 = por %p101, %p102
    %p105 = scmp.ne.s32.totalorder %s90, %s104
    %p106 = scmp.eq.s32.totalorder %s17, 0
    %p107 = por %p105, %p106
    %s109 = sadd.s32 %s108, 1
    %p112 = scmp.eq.s32.totalorder %s11, 1
    %p113 = scmp.ne.s32.totalorder %s108, %s110
    %p114 = scmp.eq.s32.totalorder %s11, 0
    %p115 = por %p113, %p114
    %p116 = scmp.ne.s32.totalorder %s108, %s110
    %p117 = scmp.eq.s32.totalorder %s16, 1
    %p118 = por %p116, %p117
    %p119 = scmp.ne.s32.totalorder %s110, %s111
    %p120 = scmp.eq.s32.totalorder %s16, 0
    %p121 = por %p119, %p120
    %p122 = scmp.ne.s32.totalorder %s110, %s111
    %p123 = scmp.eq.s32.totalorder %s17, 1
    %p124 = por %p122, %p123
    %p126 = scmp.ne.s32.totalorder %s111, %s125
    %p127 = scmp.eq.s32.totalorder %s17, 0
    %p128 = por %p126, %p127
    %s129 = ssub.s32 %s11, %s18
    %p130 = scmp.eq.s32.totalorder %s129, 0
    %s132 = sadd.s32 %s131, 1
    %s133 = scalar_select %p130, %s131, %s132
    %p136 = pneg %p130
    %p137 = scmp.eq.s32.totalorder %s11, 1
    %p138 = por %p136, %p137
    %p139 = scmp.ne.s32.totalorder %s131, %s134
    %p140 = scmp.eq.s32.totalorder %s11, 0
    %p141 = por %p139, %p140
    %p142 = scmp.ne.s32.totalorder %s131, %s134
    %p143 = scmp.eq.s32.totalorder %s16, 1
    %p144 = por %p142, %p143
    %p145 = scmp.ne.s32.totalorder %s134, %s135
    %p146 = scmp.eq.s32.totalorder %s16, 0
    %p147 = por %p145, %p146
    %p148 = scmp.ne.s32.totalorder %s134, %s135
    %p149 = scmp.eq.s32.totalorder %s17, 1
    %p150 = por %p148, %p149
    %p152 = scmp.ne.s32.totalorder %s135, %s151
    %p153 = scmp.eq.s32.totalorder %s17, 0
    %p154 = por %p152, %p153
    %p155 = scmp.le.s32.totalorder 1, %s11
    %p156 = scmp.lt.s32.totalorder %s11, 3
    %p157 = pnand %p155, %p156
    %p158 = pneg %p157
    // Predicated region
    $region9: #{net_forward.1} parent=5 // pred_check
      _
    $region10: #{net_forward.1} parent=5 // pred_check_branch
      %160 = sbr.rel (%p157) target = $region12
    $region11: #{net_forward.1} parent=5 // pred_region
      %s161 = ssub.s32 %s11, 1
      // Predicated region
      $region13: #{net_forward.1} parent=11 // pred_check
        %p162 = pneg %p58
      $region14: #{net_forward.1} parent=11 // pred_check_branch
        %164 = sbr.rel (%p162) target = $region16
      $region15: #{net_forward.1} parent=11 // pred_region
        _
      $region16: #{net_forward.1} parent=11 // pred_fallthru
        _
      // Predicated region
      $region17: #{net_forward.1} parent=11 // pred_check
        %p165 = pneg %p79
      $region18: #{net_forward.1} parent=11 // pred_check_branch
        %167 = sbr.rel (%p165) target = $region20
      $region19: #{net_forward.1} parent=11 // pred_region
        _
      $region20: #{net_forward.1} parent=11 // pred_fallthru
        _
      // Predicated region
      $region21: #{net_forward.1} parent=11 // pred_check
        %p168 = pneg %p100
      $region22: #{net_forward.1} parent=11 // pred_check_branch
        %170 = sbr.rel (%p168) target = $region24
      $region23: #{net_forward.1} parent=11 // pred_region
        _
      $region24: #{net_forward.1} parent=11 // pred_fallthru
        _
      // Predicated region
      $region25: #{net_forward.1} parent=11 // pred_check
        %p171 = pneg %p121
      $region26: #{net_forward.1} parent=11 // pred_check_branch
        %173 = sbr.rel (%p171) target = $region28
      $region27: #{net_forward.1} parent=11 // pred_region
        _
      $region28: #{net_forward.1} parent=11 // pred_fallthru
        _
    $region12: #{net_forward.1} parent=5 // pred_fallthru
      _
    %p174 = scmp.lt.s32.totalorder %s11, 2
    // Predicated region
    $region29: #{net_forward.1} parent=5 // pred_check
      %p175 = pneg %p174
    $region30: #{net_forward.1} parent=5 // pred_check_branch
      %177 = sbr.rel (%p175) target = $region32
    $region31: #{net_forward.1} parent=5 // pred_region
      // Predicated region
      $region33: #{net_forward.1} parent=31 // pred_check
        %p178 = pneg %p31
      $region34: #{net_forward.1} parent=31 // pred_check_branch
        %180 = sbr.rel (%p178) target = $region36
      $region35: #{net_forward.1} parent=31 // pred_region
        %p181 = scmp.lt.s32.totalorder %s11, 1
        %s182 = scalar_select %p181, %s11, 1
        %s183 = smul.addr %s182, 2
        %s184 = smul.addr %s183, 8
        %s185 = scalar_lea.vmem %s0, %s184
      $region36: #{net_forward.1} parent=31 // pred_fallthru
        _
    $region32: #{net_forward.1} parent=5 // pred_fallthru
      _
    %p186 = scmp.le.s32.totalorder 1, %s11
    %p187 = scmp.lt.s32.totalorder %s11, 3
    %p188 = pnand %p186, %p187
    %p189 = pneg %p188
    // Predicated region
    $region37: #{net_forward.1} parent=5 // pred_check
      _
    $region38: #{net_forward.1} parent=5 // pred_check_branch
      %191 = sbr.rel (%p188) target = $region40
    $region39: #{net_forward.1} parent=5 // pred_region
      %s192 = ssub.s32 %s11, 1
      %p193 = scmp.lt.s32.totalorder %s16, 1
      %s194 = scalar_select %p193, %s16, 1
      %s195 = smul.addr %s194, 2
      %s196 = smul.addr %s195, 8
      %s197 = scalar_lea.vmem %s0, %s196
      %p198 = pneg %p37
      %p199 = pneg %p34
      %p200 = pneg %p58
      %p201 = pneg %p55
      %p202 = pneg %p79
      %p203 = pneg %p76
      %p204 = pneg %p100
      %p205 = pneg %p97
      %p206 = pneg %p121
      %p207 = pneg %p118
      %p208 = pneg %p147
      %p209 = pneg %p144
      %p210 = scmp.lt.s32.totalorder %s16, 1
      %s211 = scalar_select %p210, %s16, 1
      %s212 = smul.addr %s211, 8
      %s213 = scalar_lea.vmem %s5, %s212
      %p214 = scmp.lt.s32.totalorder %s16, 1
      %s215 = scalar_select %p214, %s16, 1
      %s216 = smul.addr %s215, 2
      %s217 = smul.addr %s216, 8
      %s218 = scalar_lea.vmem %s0, %s217
      %p219 = scmp.lt.s32.totalorder %s16, 1
      %s220 = scalar_select %p219, %s16, 1
      %s221 = smul.addr %s220, 8
      %s222 = scalar_lea.vmem %s5, %s221
      %v223 = vld [vmem:[%s218] sm:$0xff]
      %v224 = vld [vmem:[%s218 + $0x8] sm:$0xff]
      %v225 = vld [vmem:[%s3] ss:$8 sm:$0x3]
      %v226 = vld [vmem:[%s3 + $0x1] ss:$0 sm:$0xff]
      %v227 = vld [vmem:[%s3 + $0x2] ss:$0 sm:$0xff]
      %v228 = vld [vmem:[%s3 + $0x3] ss:$0 sm:$0xff]
      %v229 = vld [vmem:[%s3 + $0x4] ss:$0 sm:$0xff]
      %v230 = vld [vmem:[%s1] sm:$0xff]
      %v231 = vld [vmem:[%s1 + $0x8] sm:$0xff]
      %v232 = vld [vmem:[%s1 + $0x10] sm:$0xff]
      %v233 = vld [vmem:[%s1 + $0x18] sm:$0xff]
      %v234 = vld [vmem:[%s1 + $0x20] sm:$0xff]
      %v235 = vld [vmem:[%s1 + $0x28] sm:$0xff]
      %v236 = vld [vmem:[%s1 + $0x30] sm:$0xff]
      %v237 = vld [vmem:[%s1 + $0x38] sm:$0xff]
      %v238 = vld [vmem:[%s1 + $0x40] sm:$0xff]
      %v239 = vld [vmem:[%s1 + $0x48] sm:$0xff]
      %v240 = vld [vmem:[%s1 + $0x50] sm:$0xff]
      %v241 = vld [vmem:[%s1 + $0x58] sm:$0xff]
      %v242 = vld [vmem:[%s1 + $0x60] sm:$0xff]
      %v243 = vld [vmem:[%s1 + $0x68] sm:$0xff]
      %v244 = vld [vmem:[%s1 + $0x70] sm:$0xff]
      %v245 = vld [vmem:[%s1 + $0x78] sm:$0xff]
      %v246 = vld [vmem:[%s1 + $0x80] sm:$0xff]
      %v247 = vld [vmem:[%s1 + $0x88] sm:$0xff]
      %v248 = vld [vmem:[%s1 + $0x90] sm:$0xff]
      %v249 = vld [vmem:[%s1 + $0x98] sm:$0xff]
      %v250 = vld [vmem:[%s1 + $0xa0] sm:$0xff]
      %v251 = vld [vmem:[%s1 + $0xa8] sm:$0xff]
      %v252 = vld [vmem:[%s1 + $0xb0] sm:$0xff]
      %v253 = vld [vmem:[%s1 + $0xb8] sm:$0xff]
      %v254 = vld [vmem:[%s1 + $0xc0] sm:$0xff]
      %v255 = vld [vmem:[%s1 + $0xc8] sm:$0xff]
      %v256 = vld [vmem:[%s1 + $0xd0] sm:$0xff]
      %v257 = vld [vmem:[%s1 + $0xd8] sm:$0xff]
      %v258 = vld [vmem:[%s1 + $0xe0] sm:$0xff]
      %v259 = vld [vmem:[%s1 + $0xe8] sm:$0xff]
      %v260 = vld [vmem:[%s1 + $0xf0] sm:$0xff]
      %v261 = vld [vmem:[%s1 + $0xf8] sm:$0xff]
      %v262 = vld [vmem:[%s1 + $0x100] sm:$0xff]
      %v263 = vld [vmem:[%s1 + $0x108] sm:$0xff]
      %v264 = vld [vmem:[%s1 + $0x110] sm:$0xff]
      %v265 = vld [vmem:[%s1 + $0x118] sm:$0xff]
      %v266 = vld [vmem:[%s1 + $0x120] sm:$0xff]
      %v267 = vld [vmem:[%s1 + $0x128] sm:$0xff]
      %v268 = vld [vmem:[%s1 + $0x130] sm:$0xff]
      %v269 = vld [vmem:[%s1 + $0x138] sm:$0xff]
      %v270 = vld [vmem:[%s1 + $0x140] sm:$0xff]
      %v271 = vld [vmem:[%s1 + $0x148] sm:$0xff]
      %v273 = vlaneseq
      %v274 = vshrl.u32 %v273, 7
      %v275 = vsub.s32 0, %v274
      %v276 = vrot.slane %v225, %v275
      %v277 = vlaneseq
      %v278 = vshrl.u32 %v277, 7
      %v279 = vsub.s32 1, %v278
      %v280 = vrot.slane %v225, %v279
      %vm283 = vcmask 326656
      %v285 = vsel %vm283, %v224, 0
      %287 = vmatprep.subr.mxu0 %v231
      %288 = vmatpush1.msra.mxu0 %v230
      %289 = vmatprep.subr.mxu0 %v233
      %290 = vmatpush1.msra.mxu0 %v232
      %291 = vmatprep.subr.mxu0 %v235
      %292 = vmatpush1.msra.mxu0 %v234
      %293 = vmatprep.subr.mxu0 %v237
      %294 = vmatpush1.msra.mxu0 %v236
      %295 = vmatprep.subr.mxu0 %v239
      %296 = vmatpush1.msra.mxu0 %v238
      %297 = vmatprep.subr.mxu0 %v241
      %298 = vmatpush1.msra.mxu0 %v240
      %299 = vmatprep.subr.mxu0 %v243
      %300 = vmatpush1.msra.mxu0 %v242
      %301 = vmatprep.subr.mxu0 %v245
      %302 = vmatpush1.msra.mxu0 %v244
      %303 = vmatprep.subr.mxu0 %v247
      %304 = vmatpush1.msra.mxu0 %v246
      %305 = vmatprep.subr.mxu0 %v249
      %306 = vmatpush1.msra.mxu0 %v248
      %307 = vmatprep.subr.mxu0 %v251
      %308 = vmatpush1.msra.mxu0 %v250
      %309 = vmatprep.subr.mxu0 %v253
      %310 = vmatpush1.msra.mxu0 %v252
      %311 = vmatprep.subr.mxu0 %v255
      %312 = vmatpush1.msra.mxu0 %v254
      %313 = vmatprep.subr.mxu0 %v257
      %314 = vmatpush1.msra.mxu0 %v256
      %315 = vmatprep.subr.mxu0 %v259
      %316 = vmatpush1.msra.mxu0 %v258
      %317 = vmatprep.subr.mxu0 %v261
      %318 = vmatpush1.msra.mxu0 %v260
      %319 = vmatprep.subr.mxu0 %v263
      %320 = vmatpush1.msra.mxu0 %v262
      %321 = vmatprep.subr.mxu0 %v265
      %322 = vmatpush1.msra.mxu0 %v264
      %323 = vmatprep.subr.mxu0 %v267
      %324 = vmatpush1.msra.mxu0 %v266
      %325 = vmatprep.subr.mxu0 %v269
      %326 = vmatpush1.msra.mxu0 %v268
      %327 = vmatprep.subr.mxu0 %v271
      %328 = vmatpush1.msra.mxu0 %v270
      %329 = vmatprep.subr.mxu0 0.0
      %330 = vmatpush1.msra.mxu0 0.0
      %331 = vmatprep.subr.mxu0 0.0
      %332 = vmatpush1.msra.mxu0 0.0
      %333 = vmatprep.subr.mxu0 0.0
      %334 = vmatpush1.msra.mxu0 0.0
      %335 = vmatprep.subr.mxu0 0.0
      %336 = vmatpush1.msra.mxu0 0.0
      %337 = vmatprep.subr.mxu0 0.0
      %338 = vmatpush1.msra.mxu0 0.0
      %339 = vmatprep.subr.mxu0 0.0
      %340 = vmatpush1.msra.mxu0 0.0
      %341 = vmatprep.subr.mxu0 0.0
      %342 = vmatpush1.msra.mxu0 0.0
      %343 = vmatprep.subr.mxu0 0.0
      %344 = vmatpush1.msra.mxu0 0.0
      %345 = vmatprep.subr.mxu0 0.0
      %346 = vmatpush1.msra.mxu0 0.0
      %347 = vmatprep.subr.mxu0 0.0
      %348 = vmatpush1.msra.mxu0 0.0
      %349 = vmatprep.subr.mxu0 0.0
      %350 = vmatpush1.msra.mxu0 0.0
      %351 = vmatprep.mubr.f32.mxu0 %v285
      %352 = vmatmul.mubr.f32.gmra.mrb[0].mxu0 %v223
      %v353 = vpop.f32.mrb[0].mxu0
      %v354 = vadd.f32 %v276, %v353
      %v355 = vpop.f32.mrb[0].mxu0
      %v356 = vadd.f32 %v280, %v355
      %357 = vdwg.mxu0
      %v358 = vtanh.pop %v354
      %v359 = vtanh.pop %v356
      %v360 = vld [vmem:[%s2] sm:$0xff]
      %v361 = vld [vmem:[%s2 + $0x8] sm:$0xff]
      %v362 = vld [vmem:[%s2 + $0x10] sm:$0xff]
      %v363 = vld [vmem:[%s2 + $0x18] sm:$0xff]
      %v364 = vld [vmem:[%s2 + $0x20] sm:$0xff]
      %v365 = vld [vmem:[%s2 + $0x28] sm:$0xff]
      %v366 = vld [vmem:[%s2 + $0x30] sm:$0xff]
      %v367 = vld [vmem:[%s2 + $0x38] sm:$0xff]
      %v368 = vld [vmem:[%s2 + $0x40] sm:$0xff]
      %v369 = vld [vmem:[%s2 + $0x48] sm:$0xff]
      %v370 = vld [vmem:[%s2 + $0x50] sm:$0xff]
      %v371 = vld [vmem:[%s2 + $0x58] sm:$0xff]
      %v372 = vld [vmem:[%s2 + $0x60] sm:$0xff]
      %v373 = vld [vmem:[%s2 + $0x68] sm:$0xff]
      %v374 = vld [vmem:[%s2 + $0x70] sm:$0xff]
      %v375 = vld [vmem:[%s2 + $0x78] sm:$0xff]
      %v376 = vld [vmem:[%s2 + $0x80] sm:$0xff]
      %v377 = vld [vmem:[%s2 + $0x88] sm:$0xff]
      %v378 = vld [vmem:[%s2 + $0x90] sm:$0xff]
      %v379 = vld [vmem:[%s2 + $0x98] sm:$0xff]
      %v380 = vld [vmem:[%s2 + $0xa0] sm:$0xff]
      %v381 = vld [vmem:[%s2 + $0xa8] sm:$0xff]
      %v382 = vld [vmem:[%s2 + $0xb0] sm:$0xff]
      %v383 = vld [vmem:[%s2 + $0xb8] sm:$0xff]
      %v384 = vld [vmem:[%s2 + $0xc0] sm:$0xff]
      %v385 = vld [vmem:[%s2 + $0xc8] sm:$0xff]
      %v386 = vld [vmem:[%s2 + $0xd0] sm:$0xff]
      %v387 = vld [vmem:[%s2 + $0xd8] sm:$0xff]
      %v388 = vld [vmem:[%s2 + $0xe0] sm:$0xff]
      %v389 = vld [vmem:[%s2 + $0xe8] sm:$0xff]
      %v390 = vld [vmem:[%s2 + $0xf0] sm:$0xff]
      %v391 = vld [vmem:[%s2 + $0xf8] sm:$0xff]
      %392 = vmatprep.subr.mxu0 0.0
      %393 = vmatpush1.msra.mxu0 %v360
      %394 = vmatprep.subr.mxu0 0.0
      %395 = vmatpush1.msra.mxu0 %v361
      %396 = vmatprep.subr.mxu0 0.0
      %397 = vmatpush1.msra.mxu0 %v362
      %398 = vmatprep.subr.mxu0 0.0
      %399 = vmatpush1.msra.mxu0 %v363
      %400 = vmatprep.subr.mxu0 0.0
      %401 = vmatpush1.msra.mxu0 %v364
      %402 = vmatprep.subr.mxu0 0.0
      %403 = vmatpush1.msra.mxu0 %v365
      %404 = vmatprep.subr.mxu0 0.0
      %405 = vmatpush1.msra.mxu0 %v366
      %406 = vmatprep.subr.mxu0 0.0
      %407 = vmatpush1.msra.mxu0 %v367
      %408 = vmatprep.subr.mxu0 0.0
      %409 = vmatpush1.msra.mxu0 %v368
      %410 = vmatprep.subr.mxu0 0.0
      %411 = vmatpush1.msra.mxu0 %v369
      %412 = vmatprep.subr.mxu0 0.0
      %413 = vmatpush1.msra.mxu0 %v370
      %414 = vmatprep.subr.mxu0 0.0
      %415 = vmatpush1.msra.mxu0 %v371
      %416 = vmatprep.subr.mxu0 0.0
      %417 = vmatpush1.msra.mxu0 %v372
      %418 = vmatprep.subr.mxu0 0.0
      %419 = vmatpush1.msra.mxu0 %v373
      %420 = vmatprep.subr.mxu0 0.0
      %421 = vmatpush1.msra.mxu0 %v374
      %422 = vmatprep.subr.mxu0 0.0
      %423 = vmatpush1.msra.mxu0 %v375
      %424 = vmatprep.subr.mxu0 0.0
      %425 = vmatpush1.msra.mxu0 %v376
      %426 = vmatprep.subr.mxu0 0.0
      %427 = vmatpush1.msra.mxu0 %v377
      %428 = vmatprep.subr.mxu0 0.0
      %429 = vmatpush1.msra.mxu0 %v378
      %430 = vmatprep.subr.mxu0 0.0
      %431 = vmatpush1.msra.mxu0 %v379
      %432 = vmatprep.subr.mxu0 0.0
      %433 = vmatpush1.msra.mxu0 %v380
      %434 = vmatprep.subr.mxu0 0.0
      %435 = vmatpush1.msra.mxu0 %v381
      %436 = vmatprep.subr.mxu0 0.0
      %437 = vmatpush1.msra.mxu0 %v382
      %438 = vmatprep.subr.mxu0 0.0
      %439 = vmatpush1.msra.mxu0 %v383
      %440 = vmatprep.subr.mxu0 0.0
      %441 = vmatpush1.msra.mxu0 %v384
      %442 = vmatprep.subr.mxu0 0.0
      %443 = vmatpush1.msra.mxu0 %v385
      %444 = vmatprep.subr.mxu0 0.0
      %445 = vmatpush1.msra.mxu0 %v386
      %446 = vmatprep.subr.mxu0 0.0
      %447 = vmatpush1.msra.mxu0 %v387
      %448 = vmatprep.subr.mxu0 0.0
      %449 = vmatpush1.msra.mxu0 %v388
      %450 = vmatprep.subr.mxu0 0.0
      %451 = vmatpush1.msra.mxu0 %v389
      %452 = vmatprep.subr.mxu0 0.0
      %453 = vmatpush1.msra.mxu0 %v390
      %454 = vmatprep.subr.mxu0 0.0
      %455 = vmatpush1.msra.mxu0 %v391
      %456 = vmatprep.mubr.f32.mxu0 %v359
      %457 = vmatmul.mubr.f32.gmra.mrb[0].mxu0 %v358
      %v458 = vpop.f32.mrb[0].mxu0
      %v459 = vadd.f32 %v226, %v458
      %v460 = vpop.f32.mrb[0].mxu0
      %461 = vdwg.mxu0
      %v462 = vtanh.pop %v459
      %v463 = vld [vmem:[%s2 + $0x100] sm:$0xff]
      %v464 = vld [vmem:[%s2 + $0x108] sm:$0xff]
      %v465 = vld [vmem:[%s2 + $0x110] sm:$0xff]
      %v466 = vld [vmem:[%s2 + $0x118] sm:$0xff]
      %v467 = vld [vmem:[%s2 + $0x120] sm:$0xff]
      %v468 = vld [vmem:[%s2 + $0x128] sm:$0xff]
      %v469 = vld [vmem:[%s2 + $0x130] sm:$0xff]
      %v470 = vld [vmem:[%s2 + $0x138] sm:$0xff]
      %v471 = vld [vmem:[%s2 + $0x140] sm:$0xff]
      %v472 = vld [vmem:[%s2 + $0x148] sm:$0xff]
      %v473 = vld [vmem:[%s2 + $0x150] sm:$0xff]
      %v474 = vld [vmem:[%s2 + $0x158] sm:$0xff]
      %v475 = vld [vmem:[%s2 + $0x160] sm:$0xff]
      %v476 = vld [vmem:[%s2 + $0x168] sm:$0xff]
      %v477 = vld [vmem:[%s2 + $0x170] sm:$0xff]
      %v478 = vld [vmem:[%s2 + $0x178] sm:$0xff]
      %v479 = vld [vmem:[%s2 + $0x180] sm:$0xff]
      %v480 = vld [vmem:[%s2 + $0x188] sm:$0xff]
      %v481 = vld [vmem:[%s2 + $0x190] sm:$0xff]
      %v482 = vld [vmem:[%s2 + $0x198] sm:$0xff]
      %v483 = vld [vmem:[%s2 + $0x1a0] sm:$0xff]
      %v484 = vld [vmem:[%s2 + $0x1a8] sm:$0xff]
      %v485 = vld [vmem:[%s2 + $0x1b0] sm:$0xff]
      %v486 = vld [vmem:[%s2 + $0x1b8] sm:$0xff]
      %v487 = vld [vmem:[%s2 + $0x1c0] sm:$0xff]
      %v488 = vld [vmem:[%s2 + $0x1c8] sm:$0xff]
      %v489 = vld [vmem:[%s2 + $0x1d0] sm:$0xff]
      %v490 = vld [vmem:[%s2 + $0x1d8] sm:$0xff]
      %v491 = vld [vmem:[%s2 + $0x1e0] sm:$0xff]
      %v492 = vld [vmem:[%s2 + $0x1e8] sm:$0xff]
      %v493 = vld [vmem:[%s2 + $0x1f0] sm:$0xff]
      %v494 = vld [vmem:[%s2 + $0x1f8] sm:$0xff]
      %v495 = vld [vmem:[%s2 + $0x200] sm:$0xff]
      %v496 = vld [vmem:[%s2 + $0x208] sm:$0xff]
      %v497 = vld [vmem:[%s2 + $0x210] sm:$0xff]
      %v498 = vld [vmem:[%s2 + $0x218] sm:$0xff]
      %vm499 = vcmask 261120
      %v501 = vsel %vm499, %v462, 0
      %503 = vmatprep.subr.mxu0 0.0
      %504 = vmatpush1.msra.mxu0 %v495
      %505 = vmatprep.subr.mxu0 0.0
      %506 = vmatpush1.msra.mxu0 %v496
      %507 = vmatprep.subr.mxu0 0.0
      %508 = vmatpush1.msra.mxu0 %v497
      %509 = vmatprep.subr.mxu0 0.0
      %510 = vmatpush1.msra.mxu0 %v498
      %511 = vmatprep.subr.mxu0 0.0
      %512 = vmatpush1.msra.mxu0 0.0
      %513 = vmatprep.subr.mxu0 0.0
      %514 = vmatpush1.msra.mxu0 0.0
      %515 = vmatprep.subr.mxu0 0.0
      %516 = vmatpush1.msra.mxu0 0.0
      %517 = vmatprep.subr.mxu0 0.0
      %518 = vmatpush1.msra.mxu0 0.0
      %519 = vmatprep.subr.mxu0 0.0
      %520 = vmatpush1.msra.mxu0 0.0
      %521 = vmatprep.subr.mxu0 0.0
      %522 = vmatpush1.msra.mxu0 0.0
      %523 = vmatprep.subr.mxu0 0.0
      %524 = vmatpush1.msra.mxu0 0.0
      %525 = vmatprep.subr.mxu0 0.0
      %526 = vmatpush1.msra.mxu0 0.0
      %527 = vmatprep.subr.mxu0 0.0
      %528 = vmatpush1.msra.mxu0 0.0
      %529 = vmatprep.subr.mxu0 0.0
      %530 = vmatpush1.msra.mxu0 0.0
      %531 = vmatprep.subr.mxu0 0.0
      %532 = vmatpush1.msra.mxu0 0.0
      %533 = vmatprep.subr.mxu0 0.0
      %534 = vmatpush1.msra.mxu0 0.0
      %535 = vmatprep.subr.mxu0 0.0
      %536 = vmatpush1.msra.mxu0 0.0
      %537 = vmatprep.subr.mxu0 0.0
      %538 = vmatpush1.msra.mxu0 0.0
      %539 = vmatprep.subr.mxu0 0.0
      %540 = vmatpush1.msra.mxu0 0.0
      %541 = vmatprep.subr.mxu0 0.0
      %542 = vmatpush1.msra.mxu0 0.0
      %543 = vmatprep.subr.mxu0 0.0
      %544 = vmatpush1.msra.mxu0 0.0
      %545 = vmatprep.subr.mxu0 0.0
      %546 = vmatpush1.msra.mxu0 0.0
      %547 = vmatprep.subr.mxu0 0.0
      %548 = vmatpush1.msra.mxu0 0.0
      %549 = vmatprep.subr.mxu0 0.0
      %550 = vmatpush1.msra.mxu0 0.0
      %551 = vmatprep.subr.mxu0 0.0
      %552 = vmatpush1.msra.mxu0 0.0
      %553 = vmatprep.subr.mxu0 0.0
      %554 = vmatpush1.msra.mxu0 0.0
      %555 = vmatprep.subr.mxu0 0.0
      %556 = vmatpush1.msra.mxu0 0.0
      %557 = vmatprep.subr.mxu0 0.0
      %558 = vmatpush1.msra.mxu0 0.0
      %559 = vmatprep.subr.mxu0 0.0
      %560 = vmatpush1.msra.mxu0 0.0
      %561 = vmatprep.subr.mxu0 0.0
      %562 = vmatpush1.msra.mxu0 0.0
      %563 = vmatprep.subr.mxu0 0.0
      %564 = vmatpush1.msra.mxu0 0.0
      %565 = vmatprep.subr.mxu0 0.0
      %566 = vmatpush1.msra.mxu0 0.0
      %567 = vmatprep.mubr.f32.mxu0 0.0
      %568 = vmatmul.mubr.f32.gmra.mrb[0].mxu0 %v501
      %v569 = vpop.f32.mrb[0].mxu0
      %v570 = vadd.f32 0.0, %v569
      %v571 = vpop.f32.mrb[0].mxu0
      %572 = vdwg.mxu0
      %573 = vmatprep.subr.mxu0 0.0
      %574 = vmatpush1.msra.mxu0 %v463
      %575 = vmatprep.subr.mxu0 0.0
      %576 = vmatpush1.msra.mxu0 %v464
      %577 = vmatprep.subr.mxu0 0.0
      %578 = vmatpush1.msra.mxu0 %v465
      %579 = vmatprep.subr.mxu0 0.0
      %580 = vmatpush1.msra.mxu0 %v466
      %581 = vmatprep.subr.mxu0 0.0
      %582 = vmatpush1.msra.mxu0 %v467
      %583 = vmatprep.subr.mxu0 0.0
      %584 = vmatpush1.msra.mxu0 %v468
      %585 = vmatprep.subr.mxu0 0.0
      %586 = vmatpush1.msra.mxu0 %v469
      %587 = vmatprep.subr.mxu0 0.0
      %588 = vmatpush1.msra.mxu0 %v470
      %589 = vmatprep.subr.mxu0 0.0
      %590 = vmatpush1.msra.mxu0 %v471
      %591 = vmatprep.subr.mxu0 0.0
      %592 = vmatpush1.msra.mxu0 %v472
      %593 = vmatprep.subr.mxu0 0.0
      %594 = vmatpush1.msra.mxu0 %v473
      %595 = vmatprep.subr.mxu0 0.0
      %596 = vmatpush1.msra.mxu0 %v474
      %597 = vmatprep.subr.mxu0 0.0
      %598 = vmatpush1.msra.mxu0 %v475
      %599 = vmatprep.subr.mxu0 0.0
      %600 = vmatpush1.msra.mxu0 %v476
      %601 = vmatprep.subr.mxu0 0.0
      %602 = vmatpush1.msra.mxu0 %v477
      %603 = vmatprep.subr.mxu0 0.0
      %604 = vmatpush1.msra.mxu0 %v478
      %605 = vmatprep.subr.mxu0 0.0
      %606 = vmatpush1.msra.mxu0 %v479
      %607 = vmatprep.subr.mxu0 0.0
      %608 = vmatpush1.msra.mxu0 %v480
      %609 = vmatprep.subr.mxu0 0.0
      %610 = vmatpush1.msra.mxu0 %v481
      %611 = vmatprep.subr.mxu0 0.0
      %612 = vmatpush1.msra.mxu0 %v482
      %613 = vmatprep.subr.mxu0 0.0
      %614 = vmatpush1.msra.mxu0 %v483
      %615 = vmatprep.subr.mxu0 0.0
      %616 = vmatpush1.msra.mxu0 %v484
      %617 = vmatprep.subr.mxu0 0.0
      %618 = vmatpush1.msra.mxu0 %v485
      %619 = vmatprep.subr.mxu0 0.0
      %620 = vmatpush1.msra.mxu0 %v486
      %621 = vmatprep.subr.mxu0 0.0
      %622 = vmatpush1.msra.mxu0 %v487
      %623 = vmatprep.subr.mxu0 0.0
      %624 = vmatpush1.msra.mxu0 %v488
      %625 = vmatprep.subr.mxu0 0.0
      %626 = vmatpush1.msra.mxu0 %v489
      %627 = vmatprep.subr.mxu0 0.0
      %628 = vmatpush1.msra.mxu0 %v490
      %629 = vmatprep.subr.mxu0 0.0
      %630 = vmatpush1.msra.mxu0 %v491
      %631 = vmatprep.subr.mxu0 0.0
      %632 = vmatpush1.msra.mxu0 %v492
      %633 = vmatprep.subr.mxu0 0.0
      %634 = vmatpush1.msra.mxu0 %v493
      %635 = vmatprep.subr.mxu0 0.0
      %636 = vmatpush1.msra.mxu0 %v494
      %637 = vmatprep.mubr.f32.mxu0 %v359
      %638 = vmatmul.mubr.f32.gmra.mrb[0].mxu0 %v358
      %v639 = vpop.f32.mrb[0].mxu0
      %v640 = vadd.f32 %v570, %v639
      %v641 = vpop.f32.mrb[0].mxu0
      %642 = vdwg.mxu0
      %v643 = vadd.f32 %v640, %v227
      %v644 = vtanh.pop %v643
      %v645 = vld [vmem:[%s2 + $0x220] sm:$0xff]
      %v646 = vld [vmem:[%s2 + $0x228] sm:$0xff]
      %v647 = vld [vmem:[%s2 + $0x230] sm:$0xff]
      %v648 = vld [vmem:[%s2 + $0x238] sm:$0xff]
      %v650 = vsel %vm499, %v644, 0
      %652 = vmatprep.subr.mxu0 0.0
      %653 = vmatpush1.msra.mxu0 %v645
      %654 = vmatprep.subr.mxu0 0.0
      %655 = vmatpush1.msra.mxu0 %v646
      %656 = vmatprep.subr.mxu0 0.0
      %657 = vmatpush1.msra.mxu0 %v647
      %658 = vmatprep.subr.mxu0 0.0
      %659 = vmatpush1.msra.mxu0 %v648
      %660 = vmatprep.subr.mxu0 0.0
      %661 = vmatpush1.msra.mxu0 0.0
      %662 = vmatprep.subr.mxu0 0.0
      %663 = vmatpush1.msra.mxu0 0.0
      %664 = vmatprep.subr.mxu0 0.0
      %665 = vmatpush1.msra.mxu0 0.0
      %666 = vmatprep.subr.mxu0 0.0
      %667 = vmatpush1.msra.mxu0 0.0
      %668 = vmatprep.subr.mxu0 0.0
      %669 = vmatpush1.msra.mxu0 0.0
      %670 = vmatprep.subr.mxu0 0.0
      %671 = vmatpush1.msra.mxu0 0.0
      %672 = vmatprep.subr.mxu0 0.0
      %673 = vmatpush1.msra.mxu0 0.0
      %674 = vmatprep.subr.mxu0 0.0
      %675 = vmatpush1.msra.mxu0 0.0
      %676 = vmatprep.subr.mxu0 0.0
      %677 = vmatpush1.msra.mxu0 0.0
      %678 = vmatprep.subr.mxu0 0.0
      %679 = vmatpush1.msra.mxu0 0.0
      %680 = vmatprep.subr.mxu0 0.0
      %681 = vmatpush1.msra.mxu0 0.0
      %682 = vmatprep.subr.mxu0 0.0
      %683 = vmatpush1.msra.mxu0 0.0
      %684 = vmatprep.subr.mxu0 0.0
      %685 = vmatpush1.msra.mxu0 0.0
      %686 = vmatprep.subr.mxu0 0.0
      %687 = vmatpush1.msra.mxu0 0.0
      %688 = vmatprep.subr.mxu0 0.0
      %689 = vmatpush1.msra.mxu0 0.0
      %690 = vmatprep.subr.mxu0 0.0
      %691 = vmatpush1.msra.mxu0 0.0
      %692 = vmatprep.subr.mxu0 0.0
      %693 = vmatpush1.msra.mxu0 0.0
      %694 = vmatprep.subr.mxu0 0.0
      %695 = vmatpush1.msra.mxu0 0.0
      %696 = vmatprep.subr.mxu0 0.0
      %697 = vmatpush1.msra.mxu0 0.0
      %698 = vmatprep.subr.mxu0 0.0
      %699 = vmatpush1.msra.mxu0 0.0
      %700 = vmatprep.subr.mxu0 0.0
      %701 = vmatpush1.msra.mxu0 0.0
      %702 = vmatprep.subr.mxu0 0.0
      %703 = vmatpush1.msra.mxu0 0.0
      %704 = vmatprep.subr.mxu0 0.0
      %705 = vmatpush1.msra.mxu0 0.0
      %706 = vmatprep.subr.mxu0 0.0
      %707 = vmatpush1.msra.mxu0 0.0
      %708 = vmatprep.subr.mxu0 0.0
      %709 = vmatpush1.msra.mxu0 0.0
      %710 = vmatprep.subr.mxu0 0.0
      %711 = vmatpush1.msra.mxu0 0.0
      %712 = vmatprep.subr.mxu0 0.0
      %713 = vmatpush1.msra.mxu0 0.0
      %714 = vmatprep.subr.mxu0 0.0
      %715 = vmatpush1.msra.mxu0 0.0
      %716 = vmatprep.mubr.f32.mxu0 0.0
      %717 = vmatmul.mubr.f32.gmra.mrb[0].mxu0 %v650
      %v718 = vpop.f32.mrb[0].mxu0
      %v719 = vadd.f32 %v228, %v718
      %v720 = vpop.f32.mrb[0].mxu0
      %721 = vdwg.mxu0
      %v722 = vtanh.pop %v719
      %v723 = vld [vmem:[%s4] sm:$0xff]
      %v724 = vld [vmem:[%s4 + $0x8] sm:$0xff]
      %v725 = vld [vmem:[%s4 + $0x10] sm:$0xff]
      %v726 = vld [vmem:[%s4 + $0x18] sm:$0xff]
      %v728 = vsel %vm499, %v722, 0
      %730 = vmatprep.subr.mxu0 0.0
      %731 = vmatpush1.msra.mxu0 %v723
      %732 = vmatprep.subr.mxu0 0.0
      %733 = vmatpush1.msra.mxu0 %v724
      %734 = vmatprep.subr.mxu0 0.0
      %735 = vmatpush1.msra.mxu0 %v725
      %736 = vmatprep.subr.mxu0 0.0
      %737 = vmatpush1.msra.mxu0 %v726
      %738 = vmatprep.subr.mxu0 0.0
      %739 = vmatpush1.msra.mxu0 0.0
      %740 = vmatprep.subr.mxu0 0.0
      %741 = vmatpush1.msra.mxu0 0.0
      %742 = vmatprep.subr.mxu0 0.0
      %743 = vmatpush1.msra.mxu0 0.0
      %744 = vmatprep.subr.mxu0 0.0
      %745 = vmatpush1.msra.mxu0 0.0
      %746 = vmatprep.subr.mxu0 0.0
      %747 = vmatpush1.msra.mxu0 0.0
      %748 = vmatprep.subr.mxu0 0.0
      %749 = vmatpush1.msra.mxu0 0.0
      %750 = vmatprep.subr.mxu0 0.0
      %751 = vmatpush1.msra.mxu0 0.0
      %752 = vmatprep.subr.mxu0 0.0
      %753 = vmatpush1.msra.mxu0 0.0
      %754 = vmatprep.subr.mxu0 0.0
      %755 = vmatpush1.msra.mxu0 0.0
      %756 = vmatprep.subr.mxu0 0.0
      %757 = vmatpush1.msra.mxu0 0.0
      %758 = vmatprep.subr.mxu0 0.0
      %759 = vmatpush1.msra.mxu0 0.0
      %760 = vmatprep.subr.mxu0 0.0
      %761 = vmatpush1.msra.mxu0 0.0
      %762 = vmatprep.subr.mxu0 0.0
      %763 = vmatpush1.msra.mxu0 0.0
      %764 = vmatprep.subr.mxu0 0.0
      %765 = vmatpush1.msra.mxu0 0.0
      %766 = vmatprep.subr.mxu0 0.0
      %767 = vmatpush1.msra.mxu0 0.0
      %768 = vmatprep.subr.mxu0 0.0
      %769 = vmatpush1.msra.mxu0 0.0
      %770 = vmatprep.subr.mxu0 0.0
      %771 = vmatpush1.msra.mxu0 0.0
      %772 = vmatprep.subr.mxu0 0.0
      %773 = vmatpush1.msra.mxu0 0.0
      %774 = vmatprep.subr.mxu0 0.0
      %775 = vmatpush1.msra.mxu0 0.0
      %776 = vmatprep.subr.mxu0 0.0
      %777 = vmatpush1.msra.mxu0 0.0
      %778 = vmatprep.subr.mxu0 0.0
      %779 = vmatpush1.msra.mxu0 0.0
      %780 = vmatprep.subr.mxu0 0.0
      %781 = vmatpush1.msra.mxu0 0.0
      %782 = vmatprep.subr.mxu0 0.0
      %783 = vmatpush1.msra.mxu0 0.0
      %784 = vmatprep.subr.mxu0 0.0
      %785 = vmatpush1.msra.mxu0 0.0
      %786 = vmatprep.subr.mxu0 0.0
      %787 = vmatpush1.msra.mxu0 0.0
      %788 = vmatprep.subr.mxu0 0.0
      %789 = vmatpush1.msra.mxu0 0.0
      %790 = vmatprep.subr.mxu0 0.0
      %791 = vmatpush1.msra.mxu0 0.0
      %792 = vmatprep.subr.mxu0 0.0
      %793 = vmatpush1.msra.mxu0 0.0
      %794 = vmatprep.mubr.f32.mxu0 0.0
      %795 = vmatmul.mubr.f32.gmra.mrb[0].mxu0 %v728
      %v796 = vpop.f32.mrb[0].mxu0
      %v797 = vadd.f32 %v229, %v796
      %v798 = vpop.f32.mrb[0].mxu0
      %799 = vdwg.mxu0
      %vm800 = vcmask 15360
      %v801 = vsel %vm800, %v797, -inf
      %802 = vmax.xlane.f32.xlu0 %v801
      %v803 = vpop.xlane.xlu0 %802
      %v804 = vsub.f32 %v797, %v803
      %v805 = vmul.f32 %v804, 1.442695
      %v806 = vpow.pop %v805
      %v807 = vsel %vm800, %v806, 0.0
      %808 = vadd.xlane.f32.xlu0 %v807
      %v809 = vpop.xlane.xlu0 %808
      %v810 = vlog2.pop %v809
      %v811 = vmul.f32 %v810, 0.6931472
      %v812 = vadd.f32 %v803, %v811
      %v813 = vsub.f32 %v797, %v812
      %814 = vst.msk [vmem:[%s222] sm:$0xff] %vm800, %v813
      %p815 = scmp.lt.s32.totalorder %s16, 1
      %s816 = scalar_select %p815, %s16, 1
      %s817 = smul.addr %s816, 8
      %s818 = scalar_lea.vmem %s5, %s817
      // Predicated region
      $region41: #{net_forward.1} parent=39 // pred_check
        %p819 = pneg %p144
      $region42: #{net_forward.1} parent=39 // pred_check_branch
        %821 = sbr.rel (%p819) target = $region44
      $region43: #{net_forward.1} parent=39 // pred_region
        _
      $region44: #{net_forward.1} parent=39 // pred_fallthru
        _
    $region40: #{net_forward.1} parent=5 // pred_fallthru
      _
    %p822 = scmp.le.s32.totalorder 2, %s11
    // Predicated region
    $region45: #{net_forward.1} parent=5 // pred_check
      %p823 = pneg %p822
    $region46: #{net_forward.1} parent=5 // pred_check_branch
      %825 = sbr.rel (%p823) target = $region48
    $region47: #{net_forward.1} parent=5 // pred_region
      %s826 = ssub.s32 %s11, 2
      // Predicated region
      $region49: #{net_forward.1} parent=47 // pred_check
        %p827 = pneg %p150
      $region50: #{net_forward.1} parent=47 // pred_check_branch
        %829 = sbr.rel (%p827) target = $region52
      $region51: #{net_forward.1} parent=47 // pred_region
        %p830 = scmp.lt.s32.totalorder %s17, 1
        %s831 = scalar_select %p830, %s17, 1
        %s832 = smul.addr %s831, 8
        %s833 = scalar_lea.vmem %s5, %s832
      $region52: #{net_forward.1} parent=47 // pred_fallthru
        _
    $region48: #{net_forward.1} parent=5 // pred_fallthru
      _
  $region6: #{net_forward.1} parent=0 // loop_footer
    %s15 = sadd.s32 1, %s11
  $region7: #{net_forward.1} parent=0 // loop_footer_branch
    %10 = sbr.rel target = $region3
  $region8: #{net_forward.1} parent=0 // loop_exit
    _

</llo_original>
